<compile_context>
chip_gen: v6e
topology: v6e:2x2x1
jax: 0.10.0
libtpu: 0.0.40
codegen_flags: <defaults>
</compile_context>

<pallas_src>
import jax
import jax.numpy as jnp
from jax.experimental import pallas as pl
from jax.experimental.pallas import tpu as pltpu

_LANES = 128    # vreg lane width; lane-dense output avoids masked vst.msk stores
_TILE_N = 512   # f32 rows per grid step -> 512*128*4 B = 256 KiB output tile


def _xw_kernel(x_ref, w_ref, o_ref):
    # One MXU matmul per tile; w (already folded & lane-padded) is VMEM-resident.
    o_ref[...] = jnp.dot(x_ref[...], w_ref[...],
                         preferred_element_type=jnp.float32)


def my_model_forward(x, w0, w1, *, tile_n=_TILE_N):
    """Forward of MyModel:  (x @ w0) @ w1  ==  x @ (w0 @ w1).

    x: (N, K) f32, w0: (K, M) f32, w1: (M, M) f32 -> (N, M) f32.
    """
    N, K = x.shape
    K2, M = w0.shape
    assert K == K2 and w1.shape == (M, M)

    # Fold the two weight matmuls once (halves MXU work, removes the serial
    # h->o dependency) and pad the output dim to a lane-dense 128 multiple.
    w = jnp.dot(w0, w1, preferred_element_type=jnp.float32)
    m_pad = max(_LANES, ((M + _LANES - 1) // _LANES) * _LANES)
    w_pad = jnp.pad(w, ((0, 0), (0, m_pad - M)))

    if N <= tile_n:
        # Small batch: gridless call, whole problem resident in VMEM.
        # NOTE: at the literal 8x10 size plain XLA would beat any custom
        # kernel; the Pallas path is kept per the task spec.
        cost = pl.CostEstimate(
            flops=2 * N * K * m_pad, transcendentals=0,
            bytes_accessed=(x.size + w_pad.size + N * m_pad) * 4)
        out_pad = pl.pallas_call(
            _xw_kernel,
            out_shape=jax.ShapeDtypeStruct((N, m_pad), jnp.float32),
            in_specs=[pl.BlockSpec(memory_space=pltpu.MemorySpace.VMEM),
                      pl.BlockSpec(memory_space=pltpu.MemorySpace.VMEM)],
            out_specs=pl.BlockSpec(memory_space=pltpu.MemorySpace.VMEM),
            cost_estimate=cost,
        )(x, w_pad)
        return out_pad[:, :M]

    # Large batch: tile only over N. Weights' index_map returns (0, 0) every
    # step so they are DMA'd once and stay VMEM-resident.
    n_pad = ((N + tile_n - 1) // tile_n) * tile_n
    x_p = jnp.pad(x, ((0, n_pad - N), (0, 0))) if n_pad != N else x
    cost = pl.CostEstimate(
        flops=2 * n_pad * K * m_pad, transcendentals=0,
        bytes_accessed=(x_p.size + w_pad.size + n_pad * m_pad) * 4)
    out_pad = pl.pallas_call(
        _xw_kernel,
        out_shape=jax.ShapeDtypeStruct((n_pad, m_pad), jnp.float32),
        grid=(n_pad // tile_n,),
        in_specs=[pl.BlockSpec((tile_n, K), lambda i: (i, 0)),
                  pl.BlockSpec((K, m_pad), lambda i: (0, 0))],
        out_specs=pl.BlockSpec((tile_n, m_pad), lambda i: (i, 0)),
        compiler_params=pltpu.CompilerParams(
            dimension_semantics=("parallel",)),
        cost_estimate=cost,
    )(x_p, w_pad)
    return out_pad[:N, :M]


if __name__ == "__main__":
    key = jax.random.PRNGKey(0)
    k_x, k_pl0, k_pl1, k_w1, k_w2 = jax.random.split(key, 5)

    # Deterministic "randn"-style parameters matching the module's __init__.
    param_list_0 = jax.random.normal(k_pl0, (10, 10), dtype=jnp.float32)
    param_list_1 = jax.random.normal(k_pl1, (10, 10), dtype=jnp.float32)       # unused in forward
    param_dict_weight1 = jax.random.normal(k_w1, (10, 10), dtype=jnp.float32)
    param_dict_weight2 = jax.random.normal(k_w2, (20, 20), dtype=jnp.float32)  # unused in forward

    # Small input, (batch, 10) so that x.mm(10x10) is valid -> gridless path.
    x_small = jax.random.normal(k_x, (8, 10), dtype=jnp.float32)
    out_small = jax.block_until_ready(
        my_model_forward(x_small, param_list_0, param_dict_weight1))
    ref_small = (x_small @ param_list_0) @ param_dict_weight1
    assert out_small.shape == (8, 10)
    assert jnp.allclose(out_small, ref_small, atol=1e-3, rtol=1e-3), \
        "small-batch mismatch vs reference"

    # Larger batch exercises the N-tiled grid path with VMEM-resident weights.
    x_big = jax.random.normal(k_x, (1024, 10), dtype=jnp.float32)
    out_big = jax.block_until_ready(
        my_model_forward(x_big, param_list_0, param_dict_weight1))
    ref_big = (x_big @ param_list_0) @ param_dict_weight1
    assert out_big.shape == (1024, 10)
    assert jnp.allclose(out_big, ref_big, atol=1e-3, rtol=1e-3), \
        "large-batch mismatch vs reference"

    print("KERNEL_OK")
</pallas_src>

<mosaic_0001>
module attributes {stable_mosaic.version = 11 : i64} {
  func.func @_xw_kernel(%arg0: memref<8x10xf32, #tpu.memory_space<vmem>>, %arg1: memref<10x128xf32, #tpu.memory_space<vmem>>, %arg2: memref<8x128xf32, #tpu.memory_space<vmem>>) attributes {dimension_semantics = [], scalar_prefetch = 0 : i64, scratch_operands = 0 : i64, tpu.core_type = #tpu.core_type<tc>} {
    %c0 = arith.constant 0 : index
    %c0_0 = arith.constant 0 : index
    %0 = vector.load %arg0[%c0, %c0_0] : memref<8x10xf32, #tpu.memory_space<vmem>>, vector<8x10xf32>
    %c0_1 = arith.constant 0 : index
    %c0_2 = arith.constant 0 : index
    %1 = vector.load %arg1[%c0_1, %c0_2] : memref<10x128xf32, #tpu.memory_space<vmem>>, vector<10x128xf32>
    %cst = arith.constant dense<0.000000e+00> : vector<8x128xf32>
    %2 = tpu.matmul %0, %1, %cst {dimension_numbers = #tpu.dot_dimension_numbers<[1], [0], [0], [1], [0, 0, 1, 1], [], []>} : vector<8x10xf32>, vector<10x128xf32>, vector<8x128xf32> -> vector<8x128xf32>
    %c0_3 = arith.constant 0 : index
    %c0_4 = arith.constant 0 : index
    %3 = vector.load %arg2[%c0_3, %c0_4] : memref<8x128xf32, #tpu.memory_space<vmem>>, vector<8x128xf32>
    tpu.vector_store %arg2[%c0_3, %c0_4], %2 {strides = array<i32>} : memref<8x128xf32, #tpu.memory_space<vmem>>, vector<8x128xf32>,
    return
  }
}

</mosaic_0001>

<llo_original>
// kernel: tpu_custom_call.1
$region0: #{tpu_custom_call.1}
  #allocation0 [shape = 'u32[]', space=smem, size = 0x4, offset = 0x4, fixed_abs, tag = 'smem constant byte address 0x4 - core index']
  #allocation1 [shape = 'u32[144,128]{1,0:T(1,128)}', space=vmem, size = 0x12000, scoped, tag = 'internal scratch']
  %s0 = inlined_call_operand.hbm [shape: f32[8,10], index: 0, kind: input, shape index: {}]
  %s1 = inlined_call_operand.hbm [shape: f32[10,128], index: 1, kind: input, shape index: {}]
  %s2 = inlined_call_operand.hbm [shape: f32[8,128], index: 2, kind: output, shape index: {}]
  %s3 = sld [smem:[#allocation0]]
  $region26: #{tpu_custom_call.1} parent=0
    _
  %s5 = ssub.s32 1, %s3
  %s6 = scalar_select 0, %s5, %s3
  $region1: #{tpu_custom_call.1} parent=0
    #allocation2 [shape = 'u8[4096]{0}', space=vmem, size = 0x1000, scoped, tag = 'input window, operand 0, single buffered']
    #allocation3 [shape = 's32[1]{0}', space=sflag, size = 0x4, scoped, tag = 'scoped memory for tpu_custom_call.1']
    #allocation4 [shape = 's32[1]{0}', space=sflag, size = 0x4, scoped, tag = 'scoped memory for tpu_custom_call.1']
    #allocation5 [shape = 'u8[8192]{0}', space=vmem, size = 0x2000, scoped, tag = 'input window, operand 1, single buffered']
    #allocation6 [shape = 's32[1]{0}', space=sflag, size = 0x4, scoped, tag = 'scoped memory for tpu_custom_call.1']
    #allocation7 [shape = 'u8[4096]{0}', space=vmem, size = 0x1000, scoped, tag = 'output window, operand 0, single buffered']
    %7 = vsyncpa [#allocation3], 0
    %8 = vsyncpa [#allocation6], 0
    %9 = vsyncpa [#allocation4], 0
    // Predicated region
    $region2: #{tpu_custom_call.1} parent=1 // pred_check
      _
    $region3: #{tpu_custom_call.1} parent=1 // pred_check_branch
      %11 = sbr.rel (0) target = $region5
    $region4: #{tpu_custom_call.1} parent=1 // pred_region
      %s13 = ssub.s32 128, 128
      %14 = vsyncadd [#allocation3], %s13
      %s16 = sshll.u32 [#allocation2], 4
      %s17 = int_to_ptr.vmem [resolvable:$true] %s16
      %19 = dma.hbm_to_vmem [thread:$0]  %s0, 128, %s17, [#allocation3]
    $region5: #{tpu_custom_call.1} parent=1 // pred_fallthru
      _
    // Predicated region
    $region6: #{tpu_custom_call.1} parent=1 // pred_check
      _
    $region7: #{tpu_custom_call.1} parent=1 // pred_check_branch
      %21 = sbr.rel (0) target = $region9
    $region8: #{tpu_custom_call.1} parent=1 // pred_region
      %s23 = ssub.s32 256, 256
      %24 = vsyncadd [#allocation6], %s23
      %s25 = sshll.u32 [#allocation5], 4
      %s26 = int_to_ptr.vmem [resolvable:$true] %s25
      %31 = dma.hbm_to_vmem [thread:$0]  %s1, 256, %s26, [#allocation6], 128, 128, 8
    $region9: #{tpu_custom_call.1} parent=1 // pred_fallthru
      _
    // Predicated region
    $region10: #{tpu_custom_call.1} parent=1 // pred_check
      _
    $region11: #{tpu_custom_call.1} parent=1 // pred_check_branch
      %33 = sbr.rel (0) target = $region13
    $region12: #{tpu_custom_call.1} parent=1 // pred_region
      %34 = dma.done [#allocation3], 128
    $region13: #{tpu_custom_call.1} parent=1 // pred_fallthru
      _
    // Predicated region
    $region14: #{tpu_custom_call.1} parent=1 // pred_check
      _
    $region15: #{tpu_custom_call.1} parent=1 // pred_check_branch
      %36 = sbr.rel (0) target = $region17
    $region16: #{tpu_custom_call.1} parent=1 // pred_region
      %37 = dma.done [#allocation6], 256
    $region17: #{tpu_custom_call.1} parent=1 // pred_fallthru
      _
    %v38 = vld [vmem:[#allocation2] sm:$0xff]
    %v39 = vld [vmem:[#allocation5] sm:$0xff]
    %v40 = vld [vmem:[#allocation5 + $0x8] sm:$0x3]
    %vm41 = vcmask 80896
    %v43 = vsel %vm41, %v38, 0
    %vm45 = vcmask 1041408
    %v47 = vsel %vm45, %v40, 0
    %49 = vmatprep.subr.mxu0 0.0
    %50 = vmatpush1.msra.mxu0 0.0
    %51 = vmatprep.subr.mxu0 0.0
    %52 = vmatpush1.msra.mxu0 0.0
    %53 = vmatprep.subr.mxu0 0.0
    %54 = vmatpush1.msra.mxu0 0.0
    %55 = vmatprep.subr.mxu0 0.0
    %56 = vmatpush1.msra.mxu0 0.0
    %57 = vmatprep.subr.mxu0 0.0
    %58 = vmatpush1.msra.mxu0 0.0
    %59 = vmatprep.subr.mxu0 0.0
    %60 = vmatpush1.msra.mxu0 0.0
    %61 = vmatprep.subr.mxu0 0.0
    %62 = vmatpush1.msra.mxu0 0.0
    %63 = vmatprep.subr.mxu0 0.0
    %64 = vmatpush1.msra.mxu0 0.0
    %65 = vmatprep.subr.mxu0 0.0
    %66 = vmatpush1.msra.mxu0 0.0
    %67 = vmatprep.subr.mxu0 0.0
    %68 = vmatpush1.msra.mxu0 0.0
    %69 = vmatprep.subr.mxu0 0.0
    %70 = vmatpush1.msra.mxu0 0.0
    %71 = vmatprep.subr.mxu0 0.0
    %72 = vmatpush1.msra.mxu0 0.0
    %73 = vmatprep.subr.mxu0 0.0
    %74 = vmatpush1.msra.mxu0 0.0
    %75 = vmatprep.subr.mxu0 0.0
    %76 = vmatpush1.msra.mxu0 0.0
    %77 = vmatprep.subr.mxu0 0.0
    %78 = vmatpush1.msra.mxu0 %v47
    %79 = vmatprep.subr.mxu0 0.0
    %80 = vmatpush1.msra.mxu0 %v39
    %81 = vmatprep.subr.mxu0 0.0
    %82 = vmatpush2.msra.mxu0 0.0
    %83 = vmatprep.subr.mxu0 0.0
    %84 = vmatpush2.msra.mxu0 0.0
    %85 = vmatprep.subr.mxu0 0.0
    %86 = vmatpush2.msra.mxu0 0.0
    %87 = vmatprep.subr.mxu0 0.0
    %88 = vmatpush2.msra.mxu0 0.0
    %89 = vmatprep.subr.mxu0 0.0
    %90 = vmatpush2.msra.mxu0 0.0
    %91 = vmatprep.subr.mxu0 0.0
    %92 = vmatpush2.msra.mxu0 0.0
    %93 = vmatprep.subr.mxu0 0.0
    %94 = vmatpush2.msra.mxu0 0.0
    %95 = vmatprep.subr.mxu0 0.0
    %96 = vmatpush2.msra.mxu0 0.0
    %97 = vmatprep.subr.mxu0 0.0
    %98 = vmatpush2.msra.mxu0 0.0
    %99 = vmatprep.subr.mxu0 0.0
    %100 = vmatpush2.msra.mxu0 0.0
    %101 = vmatprep.subr.mxu0 0.0
    %102 = vmatpush2.msra.mxu0 0.0
    %103 = vmatprep.subr.mxu0 0.0
    %104 = vmatpush2.msra.mxu0 0.0
    %105 = vmatprep.subr.mxu0 0.0
    %106 = vmatpush2.msra.mxu0 0.0
    %107 = vmatprep.subr.mxu0 0.0
    %108 = vmatpush2.msra.mxu0 0.0
    %109 = vmatprep.subr.mxu0 0.0
    %110 = vmatpush2.msra.mxu0 0.0
    %111 = vmatprep.subr.mxu0 0.0
    %112 = vmatpush2.msra.mxu0 0.0
    %113 = vmatprep.mubr.f32.mxu0 0.0
    %114 = vmatmul.mubr.f32.gmra.mxu0 %v43
    %v115 = vpop.f32.mrf.mxu0
    %v116 = vadd.f32 0.0, %v115
    %v117 = vpop.f32.mrf.mxu0
    %118 = vdwg.mxu0
    %119 = vst [vmem:[#allocation7] sm:$0xff] %v116
    // Predicated region
    $region18: #{tpu_custom_call.1} parent=1 // pred_check
      _
    $region19: #{tpu_custom_call.1} parent=1 // pred_check_branch
      %121 = sbr.rel (0) target = $region21
    $region20: #{tpu_custom_call.1} parent=1 // pred_region
      %s123 = ssub.s32 128, 128
      %124 = vsyncadd [#allocation4], %s123
      %s126 = sshll.u32 [#allocation7], 4
      %s127 = int_to_ptr.vmem [resolvable:$true] %s126
      %129 = dma.vmem_to_hbm [thread:$0]  %s127, 128, %s2, [#allocation4]
    $region21: #{tpu_custom_call.1} parent=1 // pred_fallthru
      _
    // Predicated region
    $region22: #{tpu_custom_call.1} parent=1 // pred_check
      _
    $region23: #{tpu_custom_call.1} parent=1 // pred_check_branch
      %131 = sbr.rel (0) target = $region25
    $region24: #{tpu_custom_call.1} parent=1 // pred_region
      %132 = dma.done [#allocation4], 128
    $region25: #{tpu_custom_call.1} parent=1 // pred_fallthru
      _
    %133 = vsyncpa [#allocation3], 1
    %134 = vsyncpa [#allocation6], 1
    %135 = vsyncpa [#allocation4], 1

</llo_original>
